<compile_context>
chip_gen: v5e
topology: v5e:2x2
jax: 0.10.0
libtpu: 0.0.40
codegen_flags: <defaults>
</compile_context>

<pallas_src>
import functools

import jax
import jax.numpy as jnp
from jax import lax
from jax.experimental import pallas as pl
from jax.experimental.pallas import tpu as pltpu


# ----------------------------------------------------------------------------
# Tiling helpers
# ----------------------------------------------------------------------------
def _round_up(x, m):
    return ((x + m - 1) // m) * m


def _tile_m(m, tmax=256):
    """Row tile (multiple of 8, capped at tmax) and padded row count."""
    tm = min(tmax, _round_up(m, 8))
    return tm, _round_up(m, tm)


def _tile_n(n):
    """Lane-dense column tile: 256/128 when divisible, else the full width."""
    if n % 256 == 0:
        return 256
    if n % 128 == 0:
        return 128
    return n


# ----------------------------------------------------------------------------
# Pallas kernels
# ----------------------------------------------------------------------------
def _matmul_bias_act_kernel(x_ref, w_ref, b_ref, o_ref, *, apply_relu):
    """o = act( x @ w + bias )   (BN scale already folded into w)."""
    y = jnp.dot(x_ref[...], w_ref[...], preferred_element_type=jnp.float32)
    y = y + b_ref[...]
    if apply_relu:
        y = jnp.maximum(y, 0.0)
    o_ref[...] = y.astype(o_ref.dtype)


def _conv3x3_bias_relu_kernel(ph_ref, w_ref, b_ref, o_ref, *, stride, ho, wo):
    """3x3 conv (pad=1, stride) + bias + ReLU over phase planes.

    ph_ref : (stride*stride, ph_h, ph_w, Cin)  space-to-depth planes (bf16)
    w_ref  : (9, Cin, Cout)  scale-folded HWIO weights (bf16)
    b_ref  : (1, Cout)       f32 bias
    o_ref  : (ho*wo, Cout)   bf16 output rows for one image
    """
    s = stride
    s2, _, _, cin = ph_ref.shape
    cout = w_ref.shape[-1]
    planes = [ph_ref[p] for p in range(s2)]          # each (ph_h, ph_w, Cin)
    acc = jnp.zeros((ho * wo, cout), jnp.float32)
    for dy in range(3):
        qy, ry = dy // s, dy % s
        for dx in range(3):
            qx, rx = dx // s, dx % s
            patch = planes[ry * s + rx][qy:qy + ho, qx:qx + wo, :]
            patch = patch.reshape(ho * wo, cin)
            acc = acc + jnp.dot(patch, w_ref[dy * 3 + dx],
                                preferred_element_type=jnp.float32)
    o_ref[...] = jnp.maximum(acc + b_ref[...], 0.0).astype(o_ref.dtype)


def _residual_proj_kernel(y_ref, w3_ref, b3_ref, xs_ref, ws_ref, bs_ref, o_ref):
    """o = relu( (y @ w3 + b3) + (xs @ ws + bs) )  -- projection shortcut."""
    main = jnp.dot(y_ref[...], w3_ref[...], preferred_element_type=jnp.float32)
    main = main + b3_ref[...]
    short = jnp.dot(xs_ref[...], ws_ref[...], preferred_element_type=jnp.float32)
    short = short + bs_ref[...]
    o_ref[...] = jnp.maximum(main + short, 0.0).astype(o_ref.dtype)


def _residual_identity_kernel(y_ref, w3_ref, b3_ref, xs_ref, o_ref):
    """o = relu( (y @ w3 + b3) + xs )  -- identity shortcut, no extra matmul."""
    main = jnp.dot(y_ref[...], w3_ref[...], preferred_element_type=jnp.float32)
    main = main + b3_ref[...]
    o_ref[...] = jnp.maximum(main + xs_ref[...].astype(jnp.float32),
                             0.0).astype(o_ref.dtype)


# ----------------------------------------------------------------------------
# Kernel wrappers
# ----------------------------------------------------------------------------
def matmul_bias_act(x, w, b, *, relu):
    m, k = x.shape
    n = w.shape[1]
    tm, mp = _tile_m(m)
    tn = _tile_n(n)
    if mp != m:
        x = jnp.pad(x, ((0, mp - m), (0, 0)))
    kernel = functools.partial(_matmul_bias_act_kernel, apply_relu=relu)
    out = pl.pallas_call(
        kernel,
        out_shape=jax.ShapeDtypeStruct((mp, n), jnp.bfloat16),
        grid=(mp // tm, n // tn),
        in_specs=[
            pl.BlockSpec((tm, k), lambda i, j: (i, 0)),
            pl.BlockSpec((k, tn), lambda i, j: (0, j)),
            pl.BlockSpec((1, tn), lambda i, j: (0, j)),
        ],
        out_specs=pl.BlockSpec((tm, tn), lambda i, j: (i, j)),
        compiler_params=pltpu.CompilerParams(
            dimension_semantics=("parallel", "parallel")),
    )(x, w, b)
    return out[:m] if mp != m else out


def _make_phases(y1, stride, ho, wo):
    """Space-to-depth split of the zero-padded conv2 input into stride^2
    phase planes so every in-kernel tap read is a contiguous slice."""
    n, h, w, c = y1.shape
    s = stride
    ph_h = ho + 2 // s
    ph_w = wo + 2 // s
    y1p = jnp.pad(y1, ((0, 0), (1, 1), (1, 1), (0, 0)))
    th, tw = s * ph_h, s * ph_w
    pad_h = max(0, th - y1p.shape[1])
    pad_w = max(0, tw - y1p.shape[2])
    if pad_h or pad_w:
        y1p = jnp.pad(y1p, ((0, 0), (0, pad_h), (0, pad_w), (0, 0)))
    y1p = y1p[:, :th, :tw, :]
    ph = y1p.reshape(n, ph_h, s, ph_w, s, c)
    ph = ph.transpose(0, 2, 4, 1, 3, 5).reshape(n, s * s, ph_h, ph_w, c)
    return ph


def conv3x3_bias_relu(y1, w2f, b2, stride):
    """y1: (N, H, W, Cin) bf16; w2f: (9, Cin, Cout) bf16; b2: (1, Cout) f32."""
    n, h, w, cin = y1.shape
    cout = w2f.shape[-1]
    ho = (h + 2 - 3) // stride + 1
    wo = (w + 2 - 3) // stride + 1
    ph = _make_phases(y1, stride, ho, wo)            # (N, s*s, ph_h, ph_w, Cin)
    _, s2, ph_h, ph_w, _ = ph.shape
    kernel = functools.partial(_conv3x3_bias_relu_kernel,
                               stride=stride, ho=ho, wo=wo)
    out = pl.pallas_call(
        kernel,
        out_shape=jax.ShapeDtypeStruct((n, ho * wo, cout), jnp.bfloat16),
        grid=(n,),
        in_specs=[
            pl.BlockSpec((None, s2, ph_h, ph_w, cin),
                         lambda b: (b, 0, 0, 0, 0)),
            pl.BlockSpec((9, cin, cout), lambda b: (0, 0, 0)),
            pl.BlockSpec((1, cout), lambda b: (0, 0)),
        ],
        out_specs=pl.BlockSpec((None, ho * wo, cout), lambda b: (b, 0, 0)),
        compiler_params=pltpu.CompilerParams(dimension_semantics=("parallel",)),
    )(ph, w2f, b2)
    return out                                        # (N, ho*wo, Cout)


def fused_residual_proj(y2, w3, b3, xs, ws, bs):
    m, k3 = y2.shape
    n = w3.shape[1]
    ks = xs.shape[1]
    tm, mp = _tile_m(m)
    tn = _tile_n(n)
    if mp != m:
        y2 = jnp.pad(y2, ((0, mp - m), (0, 0)))
        xs = jnp.pad(xs, ((0, mp - m), (0, 0)))
    out = pl.pallas_call(
        _residual_proj_kernel,
        out_shape=jax.ShapeDtypeStruct((mp, n), jnp.float32),
        grid=(mp // tm, n // tn),
        in_specs=[
            pl.BlockSpec((tm, k3), lambda i, j: (i, 0)),
            pl.BlockSpec((k3, tn), lambda i, j: (0, j)),
            pl.BlockSpec((1, tn), lambda i, j: (0, j)),
            pl.BlockSpec((tm, ks), lambda i, j: (i, 0)),
            pl.BlockSpec((ks, tn), lambda i, j: (0, j)),
            pl.BlockSpec((1, tn), lambda i, j: (0, j)),
        ],
        out_specs=pl.BlockSpec((tm, tn), lambda i, j: (i, j)),
        compiler_params=pltpu.CompilerParams(
            dimension_semantics=("parallel", "parallel")),
    )(y2, w3, b3, xs, ws, bs)
    return out[:m] if mp != m else out


def fused_residual_identity(y2, w3, b3, xs):
    m, k3 = y2.shape
    n = w3.shape[1]
    tm, mp = _tile_m(m)
    tn = _tile_n(n)
    if mp != m:
        y2 = jnp.pad(y2, ((0, mp - m), (0, 0)))
        xs = jnp.pad(xs, ((0, mp - m), (0, 0)))
    out = pl.pallas_call(
        _residual_identity_kernel,
        out_shape=jax.ShapeDtypeStruct((mp, n), jnp.float32),
        grid=(mp // tm, n // tn),
        in_specs=[
            pl.BlockSpec((tm, k3), lambda i, j: (i, 0)),
            pl.BlockSpec((k3, tn), lambda i, j: (0, j)),
            pl.BlockSpec((1, tn), lambda i, j: (0, j)),
            pl.BlockSpec((tm, tn), lambda i, j: (i, j)),
        ],
        out_specs=pl.BlockSpec((tm, tn), lambda i, j: (i, j)),
        compiler_params=pltpu.CompilerParams(
            dimension_semantics=("parallel", "parallel")),
    )(y2, w3, b3, xs)
    return out[:m] if mp != m else out


# ----------------------------------------------------------------------------
# Parameter construction (deterministic, synthetic)
# ----------------------------------------------------------------------------
EXPANSION = 4
BN_EPS = 1e-5


def _bn_affine(key, c):
    k1, k2, k3, k4 = jax.random.split(key, 4)
    gamma = jax.random.uniform(k1, (c,), jnp.float32, 0.5, 1.5)
    beta = 0.1 * jax.random.normal(k2, (c,), jnp.float32)
    mean = 0.1 * jax.random.normal(k3, (c,), jnp.float32)
    var = jax.random.uniform(k4, (c,), jnp.float32, 0.5, 1.5)
    scale = gamma / jnp.sqrt(var + BN_EPS)
    bias = beta - mean * scale
    return scale, bias


def make_params(key, in_channels, out_channels, stride):
    cexp = out_channels * EXPANSION
    keys = jax.random.split(key, 8)
    p = {  # conv weights stored in HWIO layout
        "w1": 0.1 * jax.random.normal(keys[0], (1, 1, in_channels, out_channels), jnp.float32),
        "w2": 0.1 * jax.random.normal(keys[1], (3, 3, out_channels, out_channels), jnp.float32),
        "w3": 0.1 * jax.random.normal(keys[2], (1, 1, out_channels, cexp), jnp.float32),
    }
    p["s1"], p["b1"] = _bn_affine(keys[3], out_channels)
    p["s2"], p["b2"] = _bn_affine(keys[4], out_channels)
    p["s3"], p["b3"] = _bn_affine(keys[5], cexp)
    p["proj"] = (stride != 1) or (in_channels != cexp)
    if p["proj"]:
        p["ws"] = 0.1 * jax.random.normal(keys[6], (1, 1, in_channels, cexp), jnp.float32)
        p["ss"], p["bs"] = _bn_affine(keys[7], cexp)
    return p


# ----------------------------------------------------------------------------
# BottleNeck forward using the Pallas kernels
# ----------------------------------------------------------------------------
def bottleneck_forward(x_nchw, params, stride):
    x = jnp.transpose(x_nchw, (0, 2, 3, 1)).astype(jnp.bfloat16)  # NCHW -> NHWC
    n, h, w, cin = x.shape
    c = params["w1"].shape[-1]
    cexp = params["w3"].shape[-1]

    # Fold eval-mode BN scales into the conv weights (bf16); keep f32 biases.
    w1f = (params["w1"].reshape(cin, c) * params["s1"][None, :]).astype(jnp.bfloat16)
    b1 = params["b1"].reshape(1, c)
    w2f = (params["w2"] * params["s2"][None, None, None, :]
           ).reshape(9, c, c).astype(jnp.bfloat16)
    b2 = params["b2"].reshape(1, c)
    w3f = (params["w3"].reshape(c, cexp) * params["s3"][None, :]).astype(jnp.bfloat16)
    b3 = params["b3"].reshape(1, cexp)

    # --- conv1 (1x1) + BN + ReLU -------------------------------------------
    y1 = matmul_bias_act(x.reshape(n * h * w, cin), w1f, b1, relu=True)
    y1 = y1.reshape(n, h, w, c)

    # --- conv2 (3x3, stride, pad=1) + BN + ReLU -- in-kernel, no im2col -----
    ho = (h + 2 - 3) // stride + 1
    wo = (w + 2 - 3) // stride + 1
    y2 = conv3x3_bias_relu(y1, w2f, b2, stride).reshape(n * ho * wo, c)

    # --- conv3 (1x1) + BN, shortcut, add, ReLU ------------------------------
    xs = x[:, ::stride, ::stride, :].reshape(n * ho * wo, cin)
    if params["proj"]:
        wsf = (params["ws"].reshape(cin, cexp) * params["ss"][None, :]).astype(jnp.bfloat16)
        bs = params["bs"].reshape(1, cexp)
        out = fused_residual_proj(y2, w3f, b3, xs, wsf, bs)
    else:
        out = fused_residual_identity(y2, w3f, b3, xs)
    out = out.reshape(n, ho, wo, cexp)
    return jnp.transpose(out, (0, 3, 1, 2)).astype(jnp.float32)  # NHWC -> NCHW


# ----------------------------------------------------------------------------
# Pure-JAX f32 reference (lax.conv) for correctness check
# ----------------------------------------------------------------------------
def bottleneck_reference(x_nchw, params, stride):
    dn = ("NHWC", "HWIO", "NHWC")
    x = jnp.transpose(x_nchw, (0, 2, 3, 1)).astype(jnp.float32)

    def bn(y, s, b):
        return y * s.reshape(1, 1, 1, -1) + b.reshape(1, 1, 1, -1)

    y = lax.conv_general_dilated(x, params["w1"], (1, 1), "VALID", dimension_numbers=dn)
    y = jnp.maximum(bn(y, params["s1"], params["b1"]), 0.0)
    y = lax.conv_general_dilated(y, params["w2"], (stride, stride),
                                 ((1, 1), (1, 1)), dimension_numbers=dn)
    y = jnp.maximum(bn(y, params["s2"], params["b2"]), 0.0)
    y = lax.conv_general_dilated(y, params["w3"], (1, 1), "VALID", dimension_numbers=dn)
    y = bn(y, params["s3"], params["b3"])
    if params["proj"]:
        sc = lax.conv_general_dilated(x, params["ws"], (stride, stride), "VALID",
                                      dimension_numbers=dn)
        sc = bn(sc, params["ss"], params["bs"])
    else:
        sc = x
    out = jnp.maximum(y + sc, 0.0)
    return jnp.transpose(out, (0, 3, 1, 2))


# ----------------------------------------------------------------------------
if __name__ == "__main__":
    key = jax.random.PRNGKey(0)
    kx1, kp1, kx2, kp2 = jax.random.split(key, 4)

    # Config A: projection shortcut (stride 2, channel expansion).
    batch, cin_a, cmid_a, spatial_a, stride_a = 2, 64, 32, 16, 2
    x_a = jax.random.normal(kx1, (batch, cin_a, spatial_a, spatial_a), jnp.float32)
    p_a = make_params(kp1, cin_a, cmid_a, stride_a)
    out_a = jax.block_until_ready(bottleneck_forward(x_a, p_a, stride_a))
    ref_a = jax.block_until_ready(bottleneck_reference(x_a, p_a, stride_a))
    assert out_a.shape == (batch, cmid_a * EXPANSION,
                           spatial_a // stride_a, spatial_a // stride_a), out_a.shape
    assert jnp.allclose(out_a, ref_a, atol=5e-2, rtol=5e-2), \
        float(jnp.abs(out_a - ref_a).max())

    # Config B: identity shortcut (stride 1, in_channels == out_channels * 4).
    cin_b, cmid_b, spatial_b, stride_b = 128, 32, 8, 1
    x_b = jax.random.normal(kx2, (batch, cin_b, spatial_b, spatial_b), jnp.float32)
    p_b = make_params(kp2, cin_b, cmid_b, stride_b)
    out_b = jax.block_until_ready(bottleneck_forward(x_b, p_b, stride_b))
    ref_b = jax.block_until_ready(bottleneck_reference(x_b, p_b, stride_b))
    assert out_b.shape == (batch, cmid_b * EXPANSION, spatial_b, spatial_b), out_b.shape
    assert jnp.allclose(out_b, ref_b, atol=5e-2, rtol=5e-2), \
        float(jnp.abs(out_b - ref_b).max())

    print("KERNEL_OK")
</pallas_src>

<mosaic_0001>
module attributes {stable_mosaic.version = 11 : i64} {
  func.func @_matmul_bias_act_kernel(%arg0: i32, %arg1: i32, %arg2: memref<256x64xbf16, #tpu.memory_space<vmem>>, %arg3: memref<64x32xbf16, #tpu.memory_space<vmem>>, %arg4: memref<1x32xf32, #tpu.memory_space<vmem>>, %arg5: memref<256x32xbf16, #tpu.memory_space<vmem>>) attributes {dimension_semantics = [#tpu.dimension_semantics<parallel>, #tpu.dimension_semantics<parallel>], iteration_bounds = array<i64: 2, 1>, scalar_prefetch = 0 : i64, scratch_operands = 0 : i64, tpu.core_type = #tpu.core_type<tc>, window_params = [{transform_indices = @transform_0, window_bounds = array<i64: 256, 64>}, {transform_indices = @transform_1, window_bounds = array<i64: 64, 32>}, {transform_indices = @transform_2, window_bounds = array<i64: 1, 32>}, {transform_indices = @transform_3, window_bounds = array<i64: 256, 32>}]} {
    %c0 = arith.constant 0 : index
    %c0_0 = arith.constant 0 : index
    %0 = vector.load %arg2[%c0, %c0_0] : memref<256x64xbf16, #tpu.memory_space<vmem>>, vector<256x64xbf16>
    %c0_1 = arith.constant 0 : index
    %c0_2 = arith.constant 0 : index
    %1 = vector.load %arg3[%c0_1, %c0_2] : memref<64x32xbf16, #tpu.memory_space<vmem>>, vector<64x32xbf16>
    %cst = arith.constant dense<0.000000e+00> : vector<256x32xf32>
    %2 = tpu.matmul %0, %1, %cst {dimension_numbers = #tpu.dot_dimension_numbers<[1], [0], [0], [1], [0, 0, 1, 1], [], []>} : vector<256x64xbf16>, vector<64x32xbf16>, vector<256x32xf32> -> vector<256x32xf32>
    %c0_3 = arith.constant 0 : index
    %c0_4 = arith.constant 0 : index
    %3 = vector.load %arg4[%c0_3, %c0_4] : memref<1x32xf32, #tpu.memory_space<vmem>>, vector<1x32xf32>
    %4 = vector.broadcast %3 : vector<1x32xf32> to vector<256x32xf32>
    %5 = arith.addf %2, %4 : vector<256x32xf32>
    %cst_5 = arith.constant 0.000000e+00 : f32
    %6 = vector.broadcast %cst_5 : f32 to vector<256x32xf32>
    %7 = arith.maximumf %5, %6 : vector<256x32xf32>
    %8 = arith.truncf %7 : vector<256x32xf32> to vector<256x32xbf16>
    %c0_6 = arith.constant 0 : index
    %c0_7 = arith.constant 0 : index
    %9 = vector.load %arg5[%c0_6, %c0_7] : memref<256x32xbf16, #tpu.memory_space<vmem>>, vector<256x32xbf16>
    tpu.vector_store %arg5[%c0_6, %c0_7], %8 {strides = array<i32>} : memref<256x32xbf16, #tpu.memory_space<vmem>>, vector<256x32xbf16>,
    return
  }
  func.func @transform_0(%arg0: i32, %arg1: i32) -> (i32, i32) {
    %c0_i32 = arith.constant 0 : i32
    %c0_i32_0 = arith.constant 0 : i32
    return %arg0, %c0_i32 : i32, i32
  }
  func.func @transform_1(%arg0: i32, %arg1: i32) -> (i32, i32) {
    %c0_i32 = arith.constant 0 : i32
    %c0_i32_0 = arith.constant 0 : i32
    return %c0_i32, %arg1 : i32, i32
  }
  func.func @transform_2(%arg0: i32, %arg1: i32) -> (i32, i32) {
    %c0_i32 = arith.constant 0 : i32
    %c0_i32_0 = arith.constant 0 : i32
    return %c0_i32, %arg1 : i32, i32
  }
  func.func @transform_3(%arg0: i32, %arg1: i32) -> (i32, i32) {
    %c0_i32 = arith.constant 0 : i32
    return %arg0, %arg1 : i32, i32
  }
}

</mosaic_0001>

<llo_original>
// kernel: tpu_custom_call.1
$region0: #{tpu_custom_call.1}
  #allocation0 [shape = 'u32[]', space=smem, size = 0x4, offset = 0x4, fixed_abs, tag = 'smem constant byte address 0x4 - core index']
  #allocation1 [shape = 'u32[72,128]{1,0:T(1,128)}', space=vmem, size = 0x9000, scoped, tag = 'internal scratch']
  %s0 = inlined_call_operand.vmem [shape: bf16[512,64], index: 0, kind: input, shape index: {}]
  %s1 = inlined_call_operand.vmem [shape: bf16[64,32], index: 1, kind: input, shape index: {}]
  %s2 = inlined_call_operand.vmem [shape: f32[1,32], index: 2, kind: input, shape index: {}]
  %s3 = inlined_call_operand.vmem [shape: bf16[512,32], index: 3, kind: output, shape index: {}]
  %s4 = sld [smem:[#allocation0]]
  $region45: #{tpu_custom_call.1} parent=0
    _
  %s6 = ssub.s32 1, %s4
  %s7 = scalar_select 0, %s6, %s4
  loop: start=0, step=1, limit=4
  $region2: #{tpu_custom_call.1} parent=0 // loop_pre_header
    _
  $region3: #{tpu_custom_call.1} parent=0 // loop_header
    %s9 = sphi 0, %s13
    %p10 = scmp.ge.s32.totalorder %s9, 4
    %s16 = sphi 0, %s28
    %s17 = sphi 0, %s24
    %s18 = sphi 0, %s16
    %s19 = sphi 0, %s17
    %s20 = sphi 0, %s18
    %s21 = sphi 0, %s19
    %s31 = sphi 0, %s33
    %s34 = sphi 0, %s31
    %s35 = sphi 0, %s34
    %s51 = sphi 0, %s35
    %s57 = sphi 0, %s59
    %s60 = sphi 0, %s57
    %s61 = sphi 0, %s60
    %s77 = sphi 0, %s61
    %s83 = sphi 0, %s85
    %s86 = sphi 0, %s83
    %s87 = sphi 0, %s86
    %s103 = sphi 0, %s87
    %s111 = sphi 0, %s113
    %s114 = sphi 0, %s111
    %s115 = sphi 0, %s114
    %s131 = sphi 0, %s115
  $region4: #{tpu_custom_call.1} parent=0 // loop_header_branch
    %12 = sbr.rel (%p10) target = $region8
  $region5: #{tpu_custom_call.1} parent=0 // loop_body
    %s14 = ssub.s32 %s9, 1
    %s15 = ssub.s32 %s9, 2
    %s22 = sadd.s32 1, %s17
    %p23 = scmp.ge.s32.totalorder %s22, 1
    %s24 = scalar_select %p23, 0, %s22
    %s25 = sadd.s32 1, %s16
    %s26 = scalar_select %p23, %s25, %s16
    %p27 = scmp.ge.s32.totalorder %s26, 2
    %s28 = scalar_select %p27, 0, %s26
    %s29 = ssub.s32 %s16, %s28
    %p30 = scmp.eq.s32.totalorder %s29, 0
    %s32 = sadd.s32 %s31, 1
    %s33 = scalar_select %p30, %s31, %s32
    %p36 = pneg %p30
    %p37 = scmp.eq.s32.totalorder %s9, 1
    %p38 = por %p36, %p37
    %p39 = scmp.ne.s32.totalorder %s31, %s34
    %p40 = scmp.eq.s32.totalorder %s9, 0
    %p41 = por %p39, %p40
    %p42 = scmp.ne.s32.totalorder %s31, %s34
    %p43 = scmp.eq.s32.totalorder %s14, 1
    %p44 = por %p42, %p43
    %p45 = scmp.ne.s32.totalorder %s34, %s35
    %p46 = scmp.eq.s32.totalorder %s14, 0
    %p47 = por %p45, %p46
    %p48 = scmp.ne.s32.totalorder %s34, %s35
    %p49 = scmp.eq.s32.totalorder %s15, 1
    %p50 = por %p48, %p49
    %p52 = scmp.ne.s32.totalorder %s35, %s51
    %p53 = scmp.eq.s32.totalorder %s15, 0
    %p54 = por %p52, %p53
    %s55 = ssub.s32 %s17, %s24
    %p56 = scmp.eq.s32.totalorder %s55, 0
    %s58 = sadd.s32 %s57, 1
    %s59 = scalar_select %p56, %s57, %s58
    %p62 = pneg %p56
    %p63 = scmp.eq.s32.totalorder %s9, 1
    %p64 = por %p62, %p63
    %p65 = scmp.ne.s32.totalorder %s57, %s60
    %p66 = scmp.eq.s32.totalorder %s9, 0
    %p67 = por %p65, %p66
    %p68 = scmp.ne.s32.totalorder %s57, %s60
    %p69 = scmp.eq.s32.totalorder %s14, 1
    %p70 = por %p68, %p69
    %p71 = scmp.ne.s32.totalorder %s60, %s61
    %p72 = scmp.eq.s32.totalorder %s14, 0
    %p73 = por %p71, %p72
    %p74 = scmp.ne.s32.totalorder %s60, %s61
    %p75 = scmp.eq.s32.totalorder %s15, 1
    %p76 = por %p74, %p75
    %p78 = scmp.ne.s32.totalorder %s61, %s77
    %p79 = scmp.eq.s32.totalorder %s15, 0
    %p80 = por %p78, %p79
    %s81 = ssub.s32 %s17, %s24
    %p82 = scmp.eq.s32.totalorder %s81, 0
    %s84 = sadd.s32 %s83, 1
    %s85 = scalar_select %p82, %s83, %s84
    %p88 = pneg %p82
    %p89 = scmp.eq.s32.totalorder %s9, 1
    %p90 = por %p88, %p89
    %p91 = scmp.ne.s32.totalorder %s83, %s86
    %p92 = scmp.eq.s32.totalorder %s9, 0
    %p93 = por %p91, %p92
    %p94 = scmp.ne.s32.totalorder %s83, %s86
    %p95 = scmp.eq.s32.totalorder %s14, 1
    %p96 = por %p94, %p95
    %p97 = scmp.ne.s32.totalorder %s86, %s87
    %p98 = scmp.eq.s32.totalorder %s14, 0
    %p99 = por %p97, %p98
    %p100 = scmp.ne.s32.totalorder %s86, %s87
    %p101 = scmp.eq.s32.totalorder %s15, 1
    %p102 = por %p100, %p101
    %p104 = scmp.ne.s32.totalorder %s87, %s103
    %p105 = scmp.eq.s32.totalorder %s15, 0
    %p106 = por %p104, %p105
    %s107 = ssub.s32 %s16, %s28
    %s108 = ssub.s32 %s17, %s24
    %s109 = sor.u32 %s107, %s108
    %p110 = scmp.eq.s32.totalorder %s109, 0
    %s112 = sadd.s32 %s111, 1
    %s113 = scalar_select %p110, %s111, %s112
    %p116 = pneg %p110
    %p117 = scmp.eq.s32.totalorder %s9, 1
    %p118 = por %p116, %p117
    %p119 = scmp.ne.s32.totalorder %s111, %s114
    %p120 = scmp.eq.s32.totalorder %s9, 0
    %p121 = por %p119, %p120
    %p122 = scmp.ne.s32.totalorder %s111, %s114
    %p123 = scmp.eq.s32.totalorder %s14, 1
    %p124 = por %p122, %p123
    %p125 = scmp.ne.s32.totalorder %s114, %s115
    %p126 = scmp.eq.s32.totalorder %s14, 0
    %p127 = por %p125, %p126
    %p128 = scmp.ne.s32.totalorder %s114, %s115
    %p129 = scmp.eq.s32.totalorder %s15, 1
    %p130 = por %p128, %p129
    %p132 = scmp.ne.s32.totalorder %s115, %s131
    %p133 = scmp.eq.s32.totalorder %s15, 0
    %p134 = por %p132, %p133
    %p135 = scmp.le.s32.totalorder 1, %s9
    %p136 = scmp.lt.s32.totalorder %s9, 3
    %p137 = pnand %p135, %p136
    %p138 = pneg %p137
    // Predicated region
    $region9: #{tpu_custom_call.1} parent=5 // pred_check
      _
    $region10: #{tpu_custom_call.1} parent=5 // pred_check_branch
      %140 = sbr.rel (%p137) target = $region12
    $region11: #{tpu_custom_call.1} parent=5 // pred_region
      %s141 = ssub.s32 %s9, 1
      // Predicated region
      $region13: #{tpu_custom_call.1} parent=11 // pred_check
        %p142 = pneg %p73
      $region14: #{tpu_custom_call.1} parent=11 // pred_check_branch
        %144 = sbr.rel (%p142) target = $region16
      $region15: #{tpu_custom_call.1} parent=11 // pred_region
        %p145 = scmp.lt.s32.totalorder %s19, 0
        %s146 = scalar_select %p145, %s19, 0
        %s147 = smul.addr %s146, 4
        %s148 = scalar_lea.vmem %s1, %s147
      $region16: #{tpu_custom_call.1} parent=11 // pred_fallthru
        _
      // Predicated region
      $region17: #{tpu_custom_call.1} parent=11 // pred_check
        %p149 = pneg %p99
      $region18: #{tpu_custom_call.1} parent=11 // pred_check_branch
        %151 = sbr.rel (%p149) target = $region20
      $region19: #{tpu_custom_call.1} parent=11 // pred_region
        %p152 = scmp.lt.s32.totalorder %s19, 0
        %s153 = scalar_select %p152, %s19, 0
        %s154 = scalar_lea.vmem %s2, %s153
      $region20: #{tpu_custom_call.1} parent=11 // pred_fallthru
        _
    $region12: #{tpu_custom_call.1} parent=5 // pred_fallthru
      _
    %p155 = scmp.lt.s32.totalorder %s9, 2
    // Predicated region
    $region21: #{tpu_custom_call.1} parent=5 // pred_check
      %p156 = pneg %p155
    $region22: #{tpu_custom_call.1} parent=5 // pred_check_branch
      %158 = sbr.rel (%p156) target = $region24
    $region23: #{tpu_custom_call.1} parent=5 // pred_region
      // Predicated region
      $region25: #{tpu_custom_call.1} parent=23 // pred_check
        %p159 = pneg %p41
      $region26: #{tpu_custom_call.1} parent=23 // pred_check_branch
        %161 = sbr.rel (%p159) target = $region28
      $region27: #{tpu_custom_call.1} parent=23 // pred_region
        %s162 = smul.u32 32, %s16
        %p163 = scmp.lt.s32.totalorder %s162, 63
        %s164 = scalar_select %p163, %s162, 63
        %s165 = smul.addr %s164, 4
        %s166 = scalar_lea.vmem %s0, %s165
        %s167 = smul.u32 32, %s16
      $region28: #{tpu_custom_call.1} parent=23 // pred_fallthru
        _
    $region24: #{tpu_custom_call.1} parent=5 // pred_fallthru
      _
    %p168 = scmp.le.s32.totalorder 1, %s9
    %p169 = scmp.lt.s32.totalorder %s9, 3
    %p170 = pnand %p168, %p169
    %p171 = pneg %p170
    // Predicated region
    $region29: #{tpu_custom_call.1} parent=5 // pred_check
      _
    $region30: #{tpu_custom_call.1} parent=5 // pred_check_branch
      %173 = sbr.rel (%p170) target = $region32
    $region31: #{tpu_custom_call.1} parent=5 // pred_region
      %s174 = ssub.s32 %s9, 1
      %s175 = smul.u32 32, %s18
      %p176 = scmp.lt.s32.totalorder %s175, 63
      %s177 = scalar_select %p176, %s175, 63
      %s178 = smul.addr %s177, 4
      %s179 = scalar_lea.vmem %s0, %s178
      %p180 = pneg %p47
      %p181 = pneg %p44
      %p182 = scmp.lt.s32.totalorder %s19, 0
      %s183 = scalar_select %p182, %s19, 0
      %s184 = smul.addr %s183, 4
      %s185 = scalar_lea.vmem %s1, %s184
      %p186 = pneg %p73
      %p187 = pneg %p70
      %p188 = scmp.lt.s32.totalorder %s19, 0
      %s189 = scalar_select %p188, %s19, 0
      %s190 = scalar_lea.vmem %s2, %s189
      %p191 = pneg %p99
      %p192 = pneg %p96
      %p193 = pneg %p127
      %p194 = pneg %p124
      %s195 = smul.u32 32, %s18
      %p196 = scmp.lt.s32.totalorder %s195, 63
      %s197 = scalar_select %p196, %s195, 63
      %p198 = scmp.lt.s32.totalorder %s19, 0
      %s199 = scalar_select %p198, %s19, 0
      %s200 = sadd.s32 %s199, %s197
      %s201 = smul.addr %s200, 4
      %s202 = scalar_lea.vmem %s3, %s201
      %s203 = smul.u32 32, %s18
      %p204 = scmp.lt.s32.totalorder %s203, 63
      %s205 = scalar_select %p204, %s203, 63
      %s206 = smul.addr %s205, 4
      %s207 = scalar_lea.vmem %s0, %s206
      %s208 = smul.u32 32, %s18
      %p209 = scmp.lt.s32.totalorder %s19, 0
      %s210 = scalar_select %p209, %s19, 0
      %s211 = smul.addr %s210, 4
      %s212 = scalar_lea.vmem %s1, %s211
      %p213 = scmp.lt.s32.totalorder %s19, 0
      %s214 = scalar_select %p213, %s19, 0
      %s215 = scalar_lea.vmem %s2, %s214
      %s216 = smul.u32 32, %s18
      %p217 = scmp.lt.s32.totalorder %s216, 63
      %s218 = scalar_select %p217, %s216, 63
      %p219 = scmp.lt.s32.totalorder %s19, 0
      %s220 = scalar_select %p219, %s19, 0
      %s221 = sadd.s32 %s220, %s218
      %s222 = smul.addr %s221, 4
      %s223 = scalar_lea.vmem %s3, %s222
      %s224 = smul.u32 32, %s18
      %v226 = vld [vmem:[%s207] sm:$0xf]
      %v227 = vld [vmem:[%s207 + $0x4] sm:$0xf]
      %v228 = vld [vmem:[%s207 + $0x8] sm:$0xf]
      %v229 = vld [vmem:[%s207 + $0xc] sm:$0xf]
      %v230 = vld [vmem:[%s207 + $0x10] sm:$0xf]
      %v231 = vld [vmem:[%s207 + $0x14] sm:$0xf]
      %v232 = vld [vmem:[%s207 + $0x18] sm:$0xf]
      %v233 = vld [vmem:[%s207 + $0x1c] sm:$0xf]
      %v234 = vld [vmem:[%s207 + $0x20] sm:$0xf]
      %v235 = vld [vmem:[%s207 + $0x24] sm:$0xf]
      %v236 = vld [vmem:[%s207 + $0x28] sm:$0xf]
      %v237 = vld [vmem:[%s207 + $0x2c] sm:$0xf]
      %v238 = vld [vmem:[%s207 + $0x30] sm:$0xf]
      %v239 = vld [vmem:[%s207 + $0x34] sm:$0xf]
      %v240 = vld [vmem:[%s207 + $0x38] sm:$0xf]
      %v241 = vld [vmem:[%s207 + $0x3c] sm:$0xf]
      %v242 = vld [vmem:[%s207 + $0x40] sm:$0xf]
      %v243 = vld [vmem:[%s207 + $0x44] sm:$0xf]
      %v244 = vld [vmem:[%s207 + $0x48] sm:$0xf]
      %v245 = vld [vmem:[%s207 + $0x4c] sm:$0xf]
      %v246 = vld [vmem:[%s207 + $0x50] sm:$0xf]
      %v247 = vld [vmem:[%s207 + $0x54] sm:$0xf]
      %v248 = vld [vmem:[%s207 + $0x58] sm:$0xf]
      %v249 = vld [vmem:[%s207 + $0x5c] sm:$0xf]
      %v250 = vld [vmem:[%s207 + $0x60] sm:$0xf]
      %v251 = vld [vmem:[%s207 + $0x64] sm:$0xf]
      %v252 = vld [vmem:[%s207 + $0x68] sm:$0xf]
      %v253 = vld [vmem:[%s207 + $0x6c] sm:$0xf]
      %v254 = vld [vmem:[%s207 + $0x70] sm:$0xf]
      %v255 = vld [vmem:[%s207 + $0x74] sm:$0xf]
      %v256 = vld [vmem:[%s207 + $0x78] sm:$0xf]
      %v257 = vld [vmem:[%s207 + $0x7c] sm:$0xf]
      %v258 = vld [vmem:[%s212] sm:$0xf]
      %v259 = vld [vmem:[%s212 + $0x4] sm:$0xf]
      %v260 = vld [vmem:[%s212 + $0x8] sm:$0xf]
      %v261 = vld [vmem:[%s212 + $0xc] sm:$0xf]
      %v262 = vld [vmem:[%s212 + $0x10] sm:$0xf]
      %v263 = vld [vmem:[%s212 + $0x14] sm:$0xf]
      %v264 = vld [vmem:[%s212 + $0x18] sm:$0xf]
      %v265 = vld [vmem:[%s212 + $0x1c] sm:$0xf]
      %v266 = vld [vmem:[%s215] sm:$0x1]
      %v268 = vperm.slane %v266, 0
      %v302 = vunpack.c.l.b16 %v226
      %v303 = vunpack.c.l.b16 %v227
      %v304 = vunpack.c.l.b16 %v228
      %v305 = vunpack.c.l.b16 %v229
      %v306 = vunpack.c.l.b16 %v230
      %v307 = vunpack.c.l.b16 %v231
      %v308 = vunpack.c.l.b16 %v232
      %v309 = vunpack.c.l.b16 %v233
      %v310 = vunpack.c.l.b16 %v234
      %v311 = vunpack.c.l.b16 %v235
      %v312 = vunpack.c.l.b16 %v236
      %v313 = vunpack.c.l.b16 %v237
      %v314 = vunpack.c.l.b16 %v238
      %v315 = vunpack.c.l.b16 %v239
      %v316 = vunpack.c.l.b16 %v240
      %v317 = vunpack.c.l.b16 %v241
      %v318 = vunpack.c.l.b16 %v242
      %v319 = vunpack.c.l.b16 %v243
      %v320 = vunpack.c.l.b16 %v244
      %v321 = vunpack.c.l.b16 %v245
      %v322 = vunpack.c.l.b16 %v246
      %v323 = vunpack.c.l.b16 %v247
      %v324 = vunpack.c.l.b16 %v248
      %v325 = vunpack.c.l.b16 %v249
      %v326 = vunpack.c.l.b16 %v250
      %v327 = vunpack.c.l.b16 %v251
      %v328 = vunpack.c.l.b16 %v252
      %v329 = vunpack.c.l.b16 %v253
      %v330 = vunpack.c.l.b16 %v254
      %v331 = vunpack.c.l.b16 %v255
      %v332 = vunpack.c.l.b16 %v256
      %v333 = vunpack.c.l.b16 %v257
      %v334 = vpack.c.b16 %v303, %v302
      %v335 = vpack.c.b16 %v305, %v304
      %v336 = vpack.c.b16 %v307, %v306
      %v337 = vpack.c.b16 %v309, %v308
      %v338 = vpack.c.b16 %v311, %v310
      %v339 = vpack.c.b16 %v313, %v312
      %v340 = vpack.c.b16 %v315, %v314
      %v341 = vpack.c.b16 %v317, %v316
      %v342 = vpack.c.b16 %v319, %v318
      %v343 = vpack.c.b16 %v321, %v320
      %v344 = vpack.c.b16 %v323, %v322
      %v345 = vpack.c.b16 %v325, %v324
      %v346 = vpack.c.b16 %v327, %v326
      %v347 = vpack.c.b16 %v329, %v328
      %v348 = vpack.c.b16 %v331, %v330
      %v349 = vpack.c.b16 %v333, %v332
      %v358 = vunpack.c.l.b16 %v258
      %v359 = vunpack.c.l.b16 %v259
      %v360 = vunpack.c.l.b16 %v260
      %v361 = vunpack.c.l.b16 %v261
      %v362 = vunpack.c.l.b16 %v262
      %v363 = vunpack.c.l.b16 %v263
      %v364 = vunpack.c.l.b16 %v264
      %v365 = vunpack.c.l.b16 %v265
      %v366 = vpack.c.b16 %v359, %v358
      %v367 = vpack.c.b16 %v361, %v360
      %v368 = vpack.c.b16 %v363, %v362
      %v369 = vpack.c.b16 %v365, %v364
      %vm374 = vcmask 523264
      %v376 = vsel %vm374, %v334, 0
      %v379 = vsel %vm374, %v335, 0
      %v382 = vsel %vm374, %v336, 0
      %v385 = vsel %vm374, %v337, 0
      %v388 = vsel %vm374, %v338, 0
      %v391 = vsel %vm374, %v339, 0
      %v394 = vsel %vm374, %v340, 0
      %v397 = vsel %vm374, %v341, 0
      %v400 = vsel %vm374, %v342, 0
      %v403 = vsel %vm374, %v343, 0
      %v406 = vsel %vm374, %v344, 0
      %v409 = vsel %vm374, %v345, 0
      %v412 = vsel %vm374, %v346, 0
      %v415 = vsel %vm374, %v347, 0
      %v418 = vsel %vm374, %v348, 0
      %v421 = vsel %vm374, %v349, 0
      %423 = vmatpush.bf16.msra.mxu0 0
      %424 = vmatpush.bf16.msra.mxu0 0
      %425 = vmatpush.bf16.msra.mxu0 0
      %426 = vmatpush.bf16.msra.mxu0 0
      %427 = vmatpush.bf16.msra.mxu0 %v369
      %428 = vmatpush.bf16.msra.mxu0 %v368
      %429 = vmatpush.bf16.msra.mxu0 %v367
      %430 = vmatpush.bf16.msra.mxu0 %v366
      %431 = vmatmul.bf16.gmra.mxu0 %v376
      %v432 = vpop.f32.mrf.mxu0
      %v433 = vadd.f32 %v268, %v432
      %v434 = vpop.f32.mrf.mxu0
      %v435 = vadd.f32 %v268, %v434
      %436 = vmatmul.bf16.gmra.mxu0 %v379
      %v437 = vpop.f32.mrf.mxu0
      %v438 = vadd.f32 %v268, %v437
      %v439 = vpop.f32.mrf.mxu0
      %v440 = vadd.f32 %v268, %v439
      %441 = vmatmul.bf16.gmra.mxu0 %v382
      %v442 = vpop.f32.mrf.mxu0
      %v443 = vadd.f32 %v268, %v442
      %v444 = vpop.f32.mrf.mxu0
      %v445 = vadd.f32 %v268, %v444
      %446 = vmatmul.bf16.gmra.mxu0 %v385
      %v447 = vpop.f32.mrf.mxu0
      %v448 = vadd.f32 %v268, %v447
      %v449 = vpop.f32.mrf.mxu0
      %v450 = vadd.f32 %v268, %v449
      %451 = vmatmul.bf16.gmra.mxu0 %v388
      %v452 = vpop.f32.mrf.mxu0
      %v453 = vadd.f32 %v268, %v452
      %v454 = vpop.f32.mrf.mxu0
      %v455 = vadd.f32 %v268, %v454
      %456 = vmatmul.bf16.gmra.mxu0 %v391
      %v457 = vpop.f32.mrf.mxu0
      %v458 = vadd.f32 %v268, %v457
      %v459 = vpop.f32.mrf.mxu0
      %v460 = vadd.f32 %v268, %v459
      %461 = vmatmul.bf16.gmra.mxu0 %v394
      %v462 = vpop.f32.mrf.mxu0
      %v463 = vadd.f32 %v268, %v462
      %v464 = vpop.f32.mrf.mxu0
      %v465 = vadd.f32 %v268, %v464
      %466 = vmatmul.bf16.gmra.mxu0 %v397
      %v467 = vpop.f32.mrf.mxu0
      %v468 = vadd.f32 %v268, %v467
      %v469 = vpop.f32.mrf.mxu0
      %v470 = vadd.f32 %v268, %v469
      %471 = vmatmul.bf16.gmra.mxu0 %v400
      %v472 = vpop.f32.mrf.mxu0
      %v473 = vadd.f32 %v268, %v472
      %v474 = vpop.f32.mrf.mxu0
      %v475 = vadd.f32 %v268, %v474
      %476 = vmatmul.bf16.gmra.mxu0 %v403
      %v477 = vpop.f32.mrf.mxu0
      %v478 = vadd.f32 %v268, %v477
      %v479 = vpop.f32.mrf.mxu0
      %v480 = vadd.f32 %v268, %v479
      %481 = vmatmul.bf16.gmra.mxu0 %v406
      %v482 = vpop.f32.mrf.mxu0
      %v483 = vadd.f32 %v268, %v482
      %v484 = vpop.f32.mrf.mxu0
      %v485 = vadd.f32 %v268, %v484
      %486 = vmatmul.bf16.gmra.mxu0 %v409
      %v487 = vpop.f32.mrf.mxu0
      %v488 = vadd.f32 %v268, %v487
      %v489 = vpop.f32.mrf.mxu0
      %v490 = vadd.f32 %v268, %v489
      %491 = vmatmul.bf16.gmra.mxu0 %v412
      %v492 = vpop.f32.mrf.mxu0
      %v493 = vadd.f32 %v268, %v492
      %v494 = vpop.f32.mrf.mxu0
      %v495 = vadd.f32 %v268, %v494
      %496 = vmatmul.bf16.gmra.mxu0 %v415
      %v497 = vpop.f32.mrf.mxu0
      %v498 = vadd.f32 %v268, %v497
      %v499 = vpop.f32.mrf.mxu0
      %v500 = vadd.f32 %v268, %v499
      %501 = vmatmul.bf16.gmra.mxu0 %v418
      %v502 = vpop.f32.mrf.mxu0
      %v503 = vadd.f32 %v268, %v502
      %v504 = vpop.f32.mrf.mxu0
      %v505 = vadd.f32 %v268, %v504
      %506 = vmatmul.bf16.gmra.mxu0 %v421
      %v507 = vpop.f32.mrf.mxu0
      %v508 = vadd.f32 %v268, %v507
      %v509 = vpop.f32.mrf.mxu0
      %v510 = vadd.f32 %v268, %v509
      %511 = vdwg.mxu0
      %v512 = vmax.f32 %v433, 0.0
      %v513 = vmax.f32 %v435, 0.0
      %v514 = vmax.f32 %v438, 0.0
      %v515 = vmax.f32 %v440, 0.0
      %v516 = vmax.f32 %v443, 0.0
      %v517 = vmax.f32 %v445, 0.0
      %v518 = vmax.f32 %v448, 0.0
      %v519 = vmax.f32 %v450, 0.0
      %v520 = vmax.f32 %v453, 0.0
      %v521 = vmax.f32 %v455, 0.0
      %v522 = vmax.f32 %v458, 0.0
      %v523 = vmax.f32 %v460, 0.0
      %v524 = vmax.f32 %v463, 0.0
      %v525 = vmax.f32 %v465, 0.0
      %v526 = vmax.f32 %v468, 0.0
      %v527 = vmax.f32 %v470, 0.0
      %v528 = vmax.f32 %v473, 0.0
      %v529 = vmax.f32 %v475, 0.0
      %v530 = vmax.f32 %v478, 0.0
      %v531 = vmax.f32 %v480, 0.0
      %v532 = vmax.f32 %v483, 0.0
      %v533 = vmax.f32 %v485, 0.0
      %v534 = vmax.f32 %v488, 0.0
      %v535 = vmax.f32 %v490, 0.0
      %v536 = vmax.f32 %v493, 0.0
      %v537 = vmax.f32 %v495, 0.0
      %v538 = vmax.f32 %v498, 0.0
      %v539 = vmax.f32 %v500, 0.0
      %v540 = vmax.f32 %v503, 0.0
      %v541 = vmax.f32 %v505, 0.0
      %v542 = vmax.f32 %v508, 0.0
      %v543 = vmax.f32 %v510, 0.0
      %v544 = vpack.c.bf16 %v512, %v512
      %v545 = vpack.c.bf16 %v513, %v513
      %v546 = vpack.c.bf16 %v514, %v514
      %v547 = vpack.c.bf16 %v515, %v515
      %v548 = vpack.c.bf16 %v516, %v516
      %v549 = vpack.c.bf16 %v517, %v517
      %v550 = vpack.c.bf16 %v518, %v518
      %v551 = vpack.c.bf16 %v519, %v519
      %v552 = vpack.c.bf16 %v520, %v520
      %v553 = vpack.c.bf16 %v521, %v521
      %v554 = vpack.c.bf16 %v522, %v522
      %v555 = vpack.c.bf16 %v523, %v523
      %v556 = vpack.c.bf16 %v524, %v524
      %v557 = vpack.c.bf16 %v525, %v525
      %v558 = vpack.c.bf16 %v526, %v526
      %v559 = vpack.c.bf16 %v527, %v527
      %v560 = vpack.c.bf16 %v528, %v528
      %v561 = vpack.c.bf16 %v529, %v529
      %v562 = vpack.c.bf16 %v530, %v530
      %v563 = vpack.c.bf16 %v531, %v531
      %v564 = vpack.c.bf16 %v532, %v532
      %v565 = vpack.c.bf16 %v533, %v533
      %v566 = vpack.c.bf16 %v534, %v534
      %v567 = vpack.c.bf16 %v535, %v535
      %v568 = vpack.c.bf16 %v536, %v536
      %v569 = vpack.c.bf16 %v537, %v537
      %v570 = vpack.c.bf16 %v538, %v538
      %v571 = vpack.c.bf16 %v539, %v539
      %v572 = vpack.c.bf16 %v540, %v540
      %v573 = vpack.c.bf16 %v541, %v541
      %v574 = vpack.c.bf16 %v542, %v542
      %v575 = vpack.c.bf16 %v543, %v543
      %vm576 = vcmask 257024
      %577 = vst.msk [vmem:[%s223] sm:$0xf] %vm576, %v544
      %578 = vst.msk [vmem:[%s223 + $0x4] sm:$0xf] %vm576, %v545
      %579 = vst.msk [vmem:[%s223 + $0x8] sm:$0xf] %vm576, %v546
      %580 = vst.msk [vmem:[%s223 + $0xc] sm:$0xf] %vm576, %v547
      %581 = vst.msk [vmem:[%s223 + $0x10] sm:$0xf] %vm576, %v548
      %582 = vst.msk [vmem:[%s223 + $0x14] sm:$0xf] %vm576, %v549
      %583 = vst.msk [vmem:[%s223 + $0x18] sm:$0xf] %vm576, %v550
      %584 = vst.msk [vmem:[%s223 + $0x1c] sm:$0xf] %vm576, %v551
      %585 = vst.msk [vmem:[%s223 + $0x20] sm:$0xf] %vm576, %v552
      %586 = vst.msk [vmem:[%s223 + $0x24] sm:$0xf] %vm576, %v553
      %587 = vst.msk [vmem:[%s223 + $0x28] sm:$0xf] %vm576, %v554
      %588 = vst.msk [vmem:[%s223 + $0x2c] sm:$0xf] %vm576, %v555
      %589 = vst.msk [vmem:[%s223 + $0x30] sm:$0xf] %vm576, %v556
      %590 = vst.msk [vmem:[%s223 + $0x34] sm:$0xf] %vm576, %v557
      %591 = vst.msk [vmem:[%s223 + $0x38] sm:$0xf] %vm576, %v558
      %592 = vst.msk [vmem:[%s223 + $0x3c] sm:$0xf] %vm576, %v559
      %593 = vst.msk [vmem:[%s223 + $0x40] sm:$0xf] %vm576, %v560
      %594 = vst.msk [vmem:[%s223 + $0x44] sm:$0xf] %vm576, %v561
      %595 = vst.msk [vmem:[%s223 + $0x48] sm:$0xf] %vm576, %v562
      %596 = vst.msk [vmem:[%s223 + $0x4c] sm:$0xf] %vm576, %v563
      %597 = vst.msk [vmem:[%s223 + $0x50] sm:$0xf] %vm576, %v564
      %598 = vst.msk [vmem:[%s223 + $0x54] sm:$0xf] %vm576, %v565
      %599 = vst.msk [vmem:[%s223 + $0x58] sm:$0xf] %vm576, %v566
      %600 = vst.msk [vmem:[%s223 + $0x5c] sm:$0xf] %vm576, %v567
      %601 = vst.msk [vmem:[%s223 + $0x60] sm:$0xf] %vm576, %v568
      %602 = vst.msk [vmem:[%s223 + $0x64] sm:$0xf] %vm576, %v569
      %603 = vst.msk [vmem:[%s223 + $0x68] sm:$0xf] %vm576, %v570
      %604 = vst.msk [vmem:[%s223 + $0x6c] sm:$0xf] %vm576, %v571
      %605 = vst.msk [vmem:[%s223 + $0x70] sm:$0xf] %vm576, %v572
      %606 = vst.msk [vmem:[%s223 + $0x74] sm:$0xf] %vm576, %v573
      %607 = vst.msk [vmem:[%s223 + $0x78] sm:$0xf] %vm576, %v574
      %608 = vst.msk [vmem:[%s223 + $0x7c] sm:$0xf] %vm576, %v575
      %s609 = smul.u32 32, %s18
      %p610 = scmp.lt.s32.totalorder %s609, 63
      %s611 = scalar_select %p610, %s609, 63
      %p612 = scmp.lt.s32.totalorder %s19, 0
      %s613 = scalar_select %p612, %s19, 0
      %s614 = sadd.s32 %s613, %s611
      %s615 = smul.addr %s614, 4
      %s616 = scalar_lea.vmem %s3, %s615
      // Predicated region
      $region33: #{tpu_custom_call.1} parent=31 // pred_check
        %p617 = pneg %p124
      $region34: #{tpu_custom_call.1} parent=31 // pred_check_branch
        %619 = sbr.rel (%p617) target = $region36
      $region35: #{tpu_custom_call.1} parent=31 // pred_region
        %s620 = smul.u32 32, %s18
      $region36: #{tpu_custom_call.1} parent=31 // pred_fallthru
        _
    $region32: #{tpu_custom_call.1} parent=5 // pred_fallthru
      _
    %p621 = scmp.le.s32.totalorder 2, %s9
    // Predicated region
    $region37: #{tpu_custom_call.1} parent=5 // pred_check
      %p622 = pneg %p621
    $region38: #{tpu_custom_call.1} parent=5 // pred_check_branch
      %624 = sbr.rel (%p622) target = $region40
    $region39: #{tpu_custom_call.1} parent=5 // pred_region
      %s625 = ssub.s32 %s9, 2
      // Predicated region
      $region41: #{tpu_custom_call.1} parent=39 // pred_check
        %p626 = pneg %p130
      $region42: #{tpu_custom_call.1} parent=39 // pred_check_branch
        %628 = sbr.rel (%p626) target = $region44
      $region43: #{tpu_custom_call.1} parent=39 // pred_region
        %s629 = smul.u32 32, %s20
        %p630 = scmp.lt.s32.totalorder %s629, 63
        %s631 = scalar_select %p630, %s629, 63
        %p632 = scmp.lt.s32.totalorder %s21, 0
        %s633 = scalar_select %p632, %s21, 0
        %s634 = sadd.s32 %s633, %s631
        %s635 = smul.addr %s634, 4
        %s636 = scalar_lea.vmem %s3, %s635
      $region44: #{tpu_custom_call.1} parent=39 // pred_fallthru
        _
    $region40: #{tpu_custom_call.1} parent=5 // pred_fallthru
      _
  $region6: #{tpu_custom_call.1} parent=0 // loop_footer
    %s13 = sadd.s32 1, %s9
  $region7: #{tpu_custom_call.1} parent=0 // loop_footer_branch
    %8 = sbr.rel target = $region3
  $region8: #{tpu_custom_call.1} parent=0 // loop_exit
    _

</llo_original>
